<compile_context>
chip_gen: v7x
topology: tpu7x:2x2x1
jax: 0.10.0
libtpu: 0.0.40
codegen_flags: <defaults>
</compile_context>

<pallas_src>
import functools
import math

import jax
import jax.numpy as jnp
from jax.experimental import pallas as pl
from jax.experimental.pallas import tpu as pltpu


DEFAULT_ROWS_PER_STEP = 256                  # 128-512 is the sweet spot
DEFAULT_VMEM_TABLE_BYTES = 8 * 1024 * 1024   # keep table VMEM-resident below this


def _round_up(x: int, m: int) -> int:
    return (x + m - 1) // m * m


def _embedding_gather_kernel(ids_ref, table_ref, o_ref, scratch, sem,
                             *, rows_per_step: int, scale: float):
    """Gather `rows_per_step` table rows into `scratch` via async row copies,
    then emit one lane-dense, sublane-aligned scaled store.

    `table_ref` is either the HBM table (pl.ANY) or the VMEM-resident full
    table block; the row copies are identical either way.
    """
    base = pl.program_id(0) * rows_per_step

    # Issue all row DMAs up-front so many small gathers are in flight at once
    # (row copies are latency-bound, not bandwidth-bound).
    @pl.loop(0, rows_per_step)
    def _issue(k):
        row = ids_ref[base + k]
        pltpu.make_async_copy(
            table_ref.at[pl.ds(row, 1), :],
            scratch.at[pl.ds(k, 1), :],
            sem,
        ).start()

    # Drain: every copy signals the same byte-counting semaphore and all copies
    # are the same size, so `rows_per_step` waits guarantee all rows landed.
    @pl.loop(0, rows_per_step)
    def _drain(k):
        pltpu.make_async_copy(
            table_ref.at[pl.ds(0, 1), :],
            scratch.at[pl.ds(k, 1), :],
            sem,
        ).wait()

    # sqrt(H) scale in f32 (matters for sub-f32 tables), then a single
    # (rows_per_step, H) vreg-dense store -- no per-row reassembly/concat.
    o_ref[...] = (scratch[...].astype(jnp.float32) * scale).astype(o_ref.dtype)
    # TODO(synk): for very large H (>= ~2-4K f32), tile H (second grid axis)
    # to bound vreg pressure and per-step VMEM (matters most on v7x, 64 MiB).


def embedding(ids, table, *,
              rows_per_step: int = DEFAULT_ROWS_PER_STEP,
              vmem_table_bytes_limit: int = DEFAULT_VMEM_TABLE_BYTES):
    """ids: (B, T) int; table: (voc, H) -> (B, T, H) = table[ids] * sqrt(H)."""
    B, T = ids.shape
    voc, H = table.shape
    scale = math.sqrt(H)

    n = B * T
    # Sublane-aligned chunking; clip the chunk to the (8-aligned) problem size
    # so small problems run in one step with no trailing partial tile.
    rows_per_step = max(8, min(rows_per_step, _round_up(n, 8)))
    n_pad = _round_up(n, rows_per_step)

    flat_ids = ids.reshape(n).astype(jnp.int32)
    if n_pad != n:
        flat_ids = jnp.pad(flat_ids, (0, n_pad - n))  # pad slots gather row 0

    table_bytes = voc * H * table.dtype.itemsize
    if table_bytes <= vmem_table_bytes_limit:
        # Table fits VMEM on every generation: loaded once (constant block
        # index => no refetch), row gather is local VMEM->VMEM, zero per-row
        # HBM traffic.
        table_spec = pl.BlockSpec((voc, H), lambda i, ids_pref: (0, 0))
    else:
        # Large vocab: leave the table in HBM, gather rows by DMA.
        table_spec = pl.BlockSpec(memory_space=pl.ANY)

    grid = (n_pad // rows_per_step,)
    kernel = functools.partial(
        _embedding_gather_kernel, rows_per_step=rows_per_step, scale=scale)

    out_flat = pl.pallas_call(
        kernel,
        out_shape=jax.ShapeDtypeStruct((n_pad, H), table.dtype),
        grid_spec=pltpu.PrefetchScalarGridSpec(
            # flat ids live in SMEM; the kernel reads them as scalars to drive
            # the row copies.
            # TODO(synk): for very large B*T, chunk the pallas_call (or feed
            # ids per-step through an SMEM block) to bound SMEM usage.
            num_scalar_prefetch=1,
            grid=grid,
            in_specs=[table_spec],
            # Lane-dense, sublane-aligned (rows_per_step, H) output tile.
            out_specs=pl.BlockSpec((rows_per_step, H),
                                   lambda i, ids_pref: (i, 0)),
            scratch_shapes=[
                pltpu.VMEM((rows_per_step, H), table.dtype),
                pltpu.SemaphoreType.DMA(()),
            ],
        ),
        compiler_params=pltpu.CompilerParams(
            # Each step writes a distinct output tile; no accumulator.
            # TODO(synk): on v7x, pltpu.CORE_PARALLEL here shards the row axis
            # across both TensorCores for up to ~2x.
            dimension_semantics=("parallel",),
        ),
    )(flat_ids, table)

    if n_pad != n:
        # Only taken when rows_per_step doesn't divide B*T (extra output copy).
        out_flat = out_flat[:n]
    return out_flat.reshape(B, T, H)

# TODO(synk): bf16 tables halve HBM traffic for this bandwidth-bound lookup,
# but single-row bf16 DMA scatter hits the packed (16,128) sublane layout --
# pack row pairs to u32 via pltpu.bitcast before enabling a bf16 fast path.


if __name__ == "__main__":
    # Small shapes consistent with the module's forward: ids (B, T) -> (B, T, H).
    VOC, H = 64, 128
    B, T = 2, 8

    key = jax.random.PRNGKey(0)
    k_tab, k_ids = jax.random.split(key)
    table = jax.random.normal(k_tab, (VOC, H), dtype=jnp.float32)
    ids = jax.random.randint(k_ids, (B, T), 0, VOC, dtype=jnp.int32)

    ref = table[ids] * math.sqrt(H)

    # Path 1: small table -> VMEM-resident gather (zero per-row HBM traffic).
    out_vmem = jax.block_until_ready(embedding(ids, table))
    assert out_vmem.shape == (B, T, H)
    assert jnp.allclose(out_vmem, ref, atol=1e-5), "VMEM-resident path mismatch"

    # Path 2: force the large-vocab path (table stays in HBM, manual DMA gather).
    out_hbm = jax.block_until_ready(
        embedding(ids, table, vmem_table_bytes_limit=0))
    assert jnp.allclose(out_hbm, ref, atol=1e-5), "HBM DMA-gather path mismatch"

    print("KERNEL_OK")
</pallas_src>

<mosaic_0001>
module attributes {stable_mosaic.version = 11 : i64} {
  func.func @_embedding_gather_kernel(%arg0: i32, %arg1: memref<16xi32, #tpu.memory_space<smem>>, %arg2: memref<64x128xf32, #tpu.memory_space<vmem>>, %arg3: memref<16x128xf32, #tpu.memory_space<vmem>>, %arg4: memref<16x128xf32, #tpu.memory_space<vmem>>, %arg5: memref<!tpu.dma_semaphore, #tpu.memory_space<semaphore_mem>>) attributes {dimension_semantics = [#tpu.dimension_semantics<parallel>], iteration_bounds = array<i64: 1>, scalar_prefetch = 1 : i64, scratch_operands = 2 : i64, tpu.core_type = #tpu.core_type<tc>, window_params = [{pipeline_mode = #tpu.pipeline_mode<synchronous>, transform_indices = @transform_0, window_bounds = array<i64: 64, 128>}, {transform_indices = @transform_1, window_bounds = array<i64: 16, 128>}]} {
    %c16_i32 = arith.constant 16 : i32
    %0 = arith.muli %arg0, %c16_i32 : i32
    %c0_i32 = arith.constant 0 : i32
    %c16_i32_0 = arith.constant 16 : i32
    %1 = arith.addi %c0_i32, %c16_i32_0 : i32
    %c1_i32 = arith.constant 1 : i32
    scf.for %arg6 = %c0_i32 to %1 step %c1_i32  : i32 {
      %c1_i32_9 = arith.constant 1 : i32
      %7 = arith.muli %arg6, %c1_i32_9 : i32
      %c0_i32_10 = arith.constant 0 : i32
      %8 = arith.addi %c0_i32_10, %7 : i32
      %9 = arith.addi %0, %8 : i32
      %10 = arith.index_cast %9 : i32 to index
      %11 = memref.load %arg1[%10] : memref<16xi32, #tpu.memory_space<smem>>
      %c0_i32_11 = arith.constant 0 : i32
      %12 = tpu.memref_slice %arg2[%11, %c0_i32_11] : memref<64x128xf32, #tpu.memory_space<vmem>> -> memref<1x128xf32, #tpu.memory_space<vmem>>
      %c0_i32_12 = arith.constant 0 : i32
      %13 = tpu.memref_slice %arg4[%8, %c0_i32_12] : memref<16x128xf32, #tpu.memory_space<vmem>> -> memref<1x128xf32, #tpu.memory_space<vmem>>
      tpu.enqueue_dma source(%12 : memref<1x128xf32, #tpu.memory_space<vmem>>) target(%13 : memref<1x128xf32, #tpu.memory_space<vmem>>) target_semaphore(%arg5 : memref<!tpu.dma_semaphore, #tpu.memory_space<semaphore_mem>>)
    }
    %c16_i32_1 = arith.constant 16 : i32
    %c0_i32_2 = arith.constant 0 : i32
    %c16_i32_3 = arith.constant 16 : i32
    %2 = arith.addi %c0_i32_2, %c16_i32_3 : i32
    %c1_i32_4 = arith.constant 1 : i32
    scf.for %arg6 = %c0_i32_2 to %2 step %c1_i32_4  : i32 {
      %c1_i32_9 = arith.constant 1 : i32
      %7 = arith.muli %arg6, %c1_i32_9 : i32
      %c0_i32_10 = arith.constant 0 : i32
      %8 = arith.addi %c0_i32_10, %7 : i32
      %c0_i32_11 = arith.constant 0 : i32
      %c0_i32_12 = arith.constant 0 : i32
      %9 = tpu.memref_slice %arg2[%c0_i32_11, %c0_i32_12] : memref<64x128xf32, #tpu.memory_space<vmem>> -> memref<1x128xf32, #tpu.memory_space<vmem>>
      %c0_i32_13 = arith.constant 0 : i32
      %10 = tpu.memref_slice %arg4[%8, %c0_i32_13] : memref<16x128xf32, #tpu.memory_space<vmem>> -> memref<1x128xf32, #tpu.memory_space<vmem>>
      tpu.wait_dma2 semaphore(%arg5 : memref<!tpu.dma_semaphore, #tpu.memory_space<semaphore_mem>>) src(%9 : memref<1x128xf32, #tpu.memory_space<vmem>>) dst(%10 : memref<1x128xf32, #tpu.memory_space<vmem>>)
    }
    %c16_i32_5 = arith.constant 16 : i32
    %c0 = arith.constant 0 : index
    %c0_6 = arith.constant 0 : index
    %3 = vector.load %arg4[%c0, %c0_6] : memref<16x128xf32, #tpu.memory_space<vmem>>, vector<16x128xf32>
    %cst = arith.constant 11.3137083 : f32
    %4 = vector.broadcast %cst : f32 to vector<16x128xf32>
    %5 = arith.mulf %3, %4 : vector<16x128xf32>
    %c0_7 = arith.constant 0 : index
    %c0_8 = arith.constant 0 : index
    %6 = vector.load %arg3[%c0_7, %c0_8] : memref<16x128xf32, #tpu.memory_space<vmem>>, vector<16x128xf32>
    tpu.vector_store %arg3[%c0_7, %c0_8], %5 {strides = array<i32>} : memref<16x128xf32, #tpu.memory_space<vmem>>, vector<16x128xf32>,
    return
  }
  func.func @transform_0(%arg0: i32, %arg1: memref<16xi32, #tpu.memory_space<smem>>) -> (i32, i32) {
    %c0_i32 = arith.constant 0 : i32
    %c0_i32_0 = arith.constant 0 : i32
    %c0_i32_1 = arith.constant 0 : i32
    return %c0_i32, %c0_i32_0 : i32, i32
  }
  func.func @transform_1(%arg0: i32, %arg1: memref<16xi32, #tpu.memory_space<smem>>) -> (i32, i32) {
    %c0_i32 = arith.constant 0 : i32
    %c0_i32_0 = arith.constant 0 : i32
    return %arg0, %c0_i32 : i32, i32
  }
}

</mosaic_0001>

<llo_original>
// kernel: tpu_custom_call.1
$region0: #{tpu_custom_call.1}
  #allocation0 [shape = 'u32[]', space=smem, size = 0x4, offset = 0x4, fixed_abs, tag = 'smem constant byte address 0x4 - core index']
  #allocation1 [shape = 'u32[144,128]{1,0:T(1,128)}', space=vmem, size = 0x12000, scoped, tag = 'internal scratch']
  #allocation2 [shape = 'f32[16,128]{1,0:T(8,128)}', space=vmem, size = 0x2000, scoped, tag = 'scratch operand']
  #allocation3 [shape = 's32[1]{0}', space=sflag, size = 0x4, scoped, tag = 'scratch operand']
  #allocation4 [shape = 's32[1]{0}', space=sflag, size = 0x4, scoped, tag = 'scoped memory for tpu_custom_call.1']
  #allocation5 [shape = 'u8[512]{0}', space=smem, size = 0x200, scoped, tag = 'prefetched SMEM operand 0']
  #allocation10 [shape = 's32[]', space=sflag, size = 0x4, offset = 0, fixed_abs, tag = 'sflag constant byte address 0x0 - dummy sync flag']
  %s0 = inlined_call_operand.hbm [shape: s32[16], index: 0, kind: input, shape index: {}]
  %s1 = inlined_call_operand.hbm [shape: f32[64,128], index: 1, kind: input, shape index: {}]
  %s2 = inlined_call_operand.hbm [shape: f32[16,128], index: 2, kind: output, shape index: {}]
  %s3 = sld [smem:[#allocation0]]
  $region62: #{tpu_custom_call.1} parent=0
    _
  %s5 = ssub.s32 1, %s3
  %s6 = scalar_select 0, %s5, %s3
  %8 = dma.hbm_to_smem %s0, 16, [#allocation5], [#allocation4]
  %9 = dma.done [#allocation4], 16
  %10 = sfence
  $region1: #{tpu_custom_call.1} parent=0
    #allocation6 [shape = 'u8[32768]{0}', space=vmem, size = 0x8000, scoped, tag = 'input window, operand 1, single buffered']
    #allocation7 [shape = 's32[1]{0}', space=sflag, size = 0x4, scoped, tag = 'scoped memory for tpu_custom_call.1']
    #allocation8 [shape = 's32[1]{0}', space=sflag, size = 0x4, scoped, tag = 'scoped memory for tpu_custom_call.1']
    #allocation9 [shape = 'u8[8192]{0}', space=vmem, size = 0x2000, scoped, tag = 'output window, operand 0, single buffered']
    %11 = vsyncpa [#allocation7], 0
    %12 = vsyncpa [#allocation8], 0
    // Predicated region
    $region2: #{tpu_custom_call.1} parent=1 // pred_check
      _
    $region3: #{tpu_custom_call.1} parent=1 // pred_check_branch
      %14 = sbr.rel (0) target = $region5
    $region4: #{tpu_custom_call.1} parent=1 // pred_region
      %s16 = ssub.s32 1024, 1024
      %17 = vsyncadd [#allocation7], %s16
      %s18 = sshll.u32 [#allocation6], 4
      %s19 = int_to_ptr.vmem [resolvable:$true] %s18
      %24 = dma.hbm_to_vmem [thread:$0]  %s1, 1024, %s19, [#allocation7], 128, 128, 8
    $region5: #{tpu_custom_call.1} parent=1 // pred_fallthru
      _
    // Predicated region
    $region6: #{tpu_custom_call.1} parent=1 // pred_check
      _
    $region7: #{tpu_custom_call.1} parent=1 // pred_check_branch
      %26 = sbr.rel (0) target = $region9
    $region8: #{tpu_custom_call.1} parent=1 // pred_region
      %27 = dma.done [#allocation7], 1024
    $region9: #{tpu_custom_call.1} parent=1 // pred_fallthru
      _
    %s28 = smul.u32 0, 16
    loop: start=0, step=1, limit=16
    $region10: #{tpu_custom_call.1} parent=1 // loop_pre_header
      _
    $region11: #{tpu_custom_call.1} parent=1 // loop_header
      %s30 = sphi 0, %s34
      %p31 = scmp.ge.s32.totalorder %s30, 16
    $region12: #{tpu_custom_call.1} parent=1 // loop_header_branch
      %33 = sbr.rel (%p31) target = $region16
    $region13: #{tpu_custom_call.1} parent=1 // loop_body
      %s35 = sadd.s32 %s28, %s30
      %s36 = sld [smem:[#allocation5 + %s35]]
      %s37 = scalar_lea.vmem [#allocation6], %s36
      %s38 = scalar_lea.vmem [#allocation2], %s30
      %p40 = scmp.lt.u32.totalorder 1, 8
      %p41 = pneg %p40
      // Predicated region
      $region17: #{tpu_custom_call.1} parent=13 // pred_check
        _
      $region18: #{tpu_custom_call.1} parent=13 // pred_check_branch
        %43 = sbr.rel (%p40) target = $region20
      $region19: #{tpu_custom_call.1} parent=13 // pred_region
        %s58 = sand.u32 1, 7
        %p59 = scmp.eq.s32.totalorder %s58, 0
        %p60 = pneg %p59
        // Predicated region
        $region32: #{tpu_custom_call.1} parent=19 // pred_check
          _
        $region33: #{tpu_custom_call.1} parent=19 // pred_check_branch
          %62 = sbr.rel (%p59) target = $region35
        $region34: #{tpu_custom_call.1} parent=19 // pred_region
          %s63 = sand.u32 1, 7
          %s64 = ssub.s32 1, %s63
          %s65 = scalar_lea.vmem %s37, %s64 [#allocation6]
          %s66 = ssub.s32 1, %s63
          %s67 = scalar_lea.vmem %s38, %s66 [#allocation2]
          %s68 = sshllo.u32 0, %s63
          loop: start=0, step=1, limit=1
          $region36: #{tpu_custom_call.1} parent=34 // loop_pre_header
            _
          $region37: #{tpu_custom_call.1} parent=34 // loop_header
            %s70 = sphi 0, %s74
            %p71 = scmp.ge.s32.totalorder %s70, 1
            %s75 = sphi %s65, %s65
            %s76 = sphi %s67, %s67
          $region38: #{tpu_custom_call.1} parent=34 // loop_header_branch
            %73 = sbr.rel (%p71) target = $region42
          $region39: #{tpu_custom_call.1} parent=34 // loop_body
            %v77 = vld [vmem:[%s75] sm:%s68]
            %78 = vst [vmem:[%s76] sm:%s68] %v77
          $region40: #{tpu_custom_call.1} parent=34 // loop_footer
            %s74 = sadd.s32 1, %s70
          $region41: #{tpu_custom_call.1} parent=34 // loop_footer_branch
            %69 = sbr.rel target = $region37
          $region42: #{tpu_custom_call.1} parent=34 // loop_exit
            _
        $region35: #{tpu_custom_call.1} parent=19 // pred_fallthru
          _
      $region20: #{tpu_custom_call.1} parent=13 // pred_fallthru
        _
      // Predicated region
      $region21: #{tpu_custom_call.1} parent=13 // pred_check
        %p44 = pneg %p40
      $region22: #{tpu_custom_call.1} parent=13 // pred_check_branch
        %46 = sbr.rel (%p44) target = $region24
      $region23: #{tpu_custom_call.1} parent=13 // pred_region
        %s47 = sshllo.u32 0, 1
        loop: start=0, step=1, limit=1
        $region25: #{tpu_custom_call.1} parent=23 // loop_pre_header
          _
        $region26: #{tpu_custom_call.1} parent=23 // loop_header
          %s49 = sphi 0, %s53
          %p50 = scmp.ge.s32.totalorder %s49, 1
          %s54 = sphi %s37, %s37
          %s55 = sphi %s38, %s38
        $region27: #{tpu_custom_call.1} parent=23 // loop_header_branch
          %52 = sbr.rel (%p50) target = $region31
        $region28: #{tpu_custom_call.1} parent=23 // loop_body
          %v56 = vld [vmem:[%s54] sm:%s47]
          %57 = vst [vmem:[%s55] sm:%s47] %v56
        $region29: #{tpu_custom_call.1} parent=23 // loop_footer
          %s53 = sadd.s32 1, %s49
        $region30: #{tpu_custom_call.1} parent=23 // loop_footer_branch
          %48 = sbr.rel target = $region26
        $region31: #{tpu_custom_call.1} parent=23 // loop_exit
          _
      $region24: #{tpu_custom_call.1} parent=13 // pred_fallthru
        _
      // Predicated region
      $region43: #{tpu_custom_call.1} parent=13 // pred_check
        _
      $region44: #{tpu_custom_call.1} parent=13 // pred_check_branch
        %81 = sbr.rel (0) target = $region46
      $region45: #{tpu_custom_call.1} parent=13 // pred_region
        %82 = vsyncadd [#allocation3], 16
      $region46: #{tpu_custom_call.1} parent=13 // pred_fallthru
        _
    $region14: #{tpu_custom_call.1} parent=1 // loop_footer
      %s34 = sadd.s32 1, %s30
    $region15: #{tpu_custom_call.1} parent=1 // loop_footer_branch
      %29 = sbr.rel target = $region11
    $region16: #{tpu_custom_call.1} parent=1 // loop_exit
      _
    loop: start=0, step=1, limit=16
    $region47: #{tpu_custom_call.1} parent=1 // loop_pre_header
      _
    $region48: #{tpu_custom_call.1} parent=1 // loop_header
      %s84 = sphi 0, %s88
      %p85 = scmp.ge.s32.totalorder %s84, 16
    $region49: #{tpu_custom_call.1} parent=1 // loop_header_branch
      %87 = sbr.rel (%p85) target = $region53
    $region50: #{tpu_custom_call.1} parent=1 // loop_body
      %s89 = smul.u32 1, 1
      %s90 = sshll.u32 %s89, 4
      %91 = dma.done [#allocation3], %s90
    $region51: #{tpu_custom_call.1} parent=1 // loop_footer
      %s88 = sadd.s32 1, %s84
    $region52: #{tpu_custom_call.1} parent=1 // loop_footer_branch
      %83 = sbr.rel target = $region48
    $region53: #{tpu_custom_call.1} parent=1 // loop_exit
      _
    %v92 = vld [vmem:[#allocation2] sm:$0xff]
    %v93 = vld [vmem:[#allocation2 + $0x8] sm:$0xff]
    %v94 = vmul.f32 %v92, 11.313708
    %v95 = vmul.f32 %v93, 11.313708
    %96 = vst [vmem:[#allocation9] sm:$0xff] %v94
    %97 = vst [vmem:[#allocation9 + $0x8] sm:$0xff] %v95
    // Predicated region
    $region54: #{tpu_custom_call.1} parent=1 // pred_check
      _
    $region55: #{tpu_custom_call.1} parent=1 // pred_check_branch
      %99 = sbr.rel (0) target = $region57
    $region56: #{tpu_custom_call.1} parent=1 // pred_region
      %s101 = ssub.s32 256, 256
      %102 = vsyncadd [#allocation8], %s101
      %s103 = sshll.u32 [#allocation9], 4
      %s104 = int_to_ptr.vmem [resolvable:$true] %s103
      %109 = dma.vmem_to_hbm [thread:$0]  %s104, 256, %s2, [#allocation8], 128, 128, 8
    $region57: #{tpu_custom_call.1} parent=1 // pred_fallthru
      _
    // Predicated region
    $region58: #{tpu_custom_call.1} parent=1 // pred_check
      _
    $region59: #{tpu_custom_call.1} parent=1 // pred_check_branch
      %111 = sbr.rel (0) target = $region61
    $region60: #{tpu_custom_call.1} parent=1 // pred_region
      %112 = dma.done [#allocation8], 256
    $region61: #{tpu_custom_call.1} parent=1 // pred_fallthru
      _
    %113 = vsyncpa [#allocation7], 1
    %114 = vsyncpa [#allocation8], 1
  %115 = vsyncmov [#allocation3]
  %s116 = vpop.sfrf %115
  %p117 = scmp.eq.s32.totalorder %s116, 0
  %p118 = pneg %p117
  %120 = shalt.err (%p118)

</llo_original>
